<compile_context>
chip_gen: v7x
topology: tpu7x:2x2x1
jax: 0.10.0
libtpu: 0.0.40
codegen_flags: <defaults>
</compile_context>

<pallas_src>
import functools

import jax
import jax.numpy as jnp
from jax import lax
from jax.experimental import pallas as pl
from jax.experimental.pallas import tpu as pltpu

_LANE = 128


def _round_up(x, m):
    return ((x + m - 1) // m) * m


def _model_basic_kernel(n_timesteps):
    """Builds the kernel body with the timestep count baked in (static loop)."""

    def kernel(inp_ref, w_in_ref, b_in_ref, w_rec_ref, b_rec_ref,
               w_out_ref, b_out_ref, out_ref):
        # Transposed layout: batch is the LANE dimension.
        inp = inp_ref[...]          # (d_in,     TB)
        w_in = w_in_ref[...]        # (n_units,  d_in)   torch (out, in) layout
        w_rec = w_rec_ref[...]      # (n_units,  n_units)
        b_in = b_in_ref[...]        # (n_units,  1)  -> lane-broadcast, 1 vreg
        b_rec = b_rec_ref[...]      # (n_units,  1)

        # h0 = tanh(fc_input(inp))^T ; loop-invariant, computed once.
        h0 = jnp.tanh(
            jnp.dot(w_in, inp, preferred_element_type=jnp.float32) + b_in)

        def body(_, hidden):
            rec = jnp.tanh(
                jnp.dot(w_rec, hidden, preferred_element_type=jnp.float32)
                + b_rec)
            return hidden + rec + h0

        hidden = lax.fori_loop(0, n_timesteps, body, h0, unroll=True)

        # Output projection: (k_pad8, n_units) @ (n_units, TB) -> (k_pad8, TB).
        out_ref[...] = (
            jnp.dot(w_out_ref[...], hidden, preferred_element_type=jnp.float32)
            + b_out_ref[...])

    return kernel


def prepare_params(params, *, n_obs, n_units, max_K):
    """One-time param prep: keep torch (out, in) orientation, sublane-pad fc_output."""
    del n_obs  # shapes carried by the arrays themselves
    k_pad8 = _round_up(max_K, 8)
    w_out_pad = jnp.zeros((k_pad8, n_units), jnp.float32).at[:max_K, :].set(
        params["w_out"])
    b_out_pad = jnp.zeros((k_pad8, 1), jnp.float32).at[:max_K, 0].set(
        params["b_out"])
    return {
        "w_in": params["w_in"],                          # (n_units, 2*n_obs)
        "b_in": params["b_in"].reshape(n_units, 1),
        "w_rec": params["w_rec"],                        # (n_units, n_units)
        "b_rec": params["b_rec"].reshape(n_units, 1),
        "w_out_pad": w_out_pad,                          # (k_pad8, n_units)
        "b_out_pad": b_out_pad,                          # (k_pad8, 1)
    }


@functools.partial(
    jax.jit, static_argnames=("n_obs", "n_units", "n_timesteps", "max_K", "block_b"))
def model_basic_forward(x, prepped, *, n_obs, n_units, n_timesteps, max_K,
                        block_b=512):
    """x: (batch, 2, n_obs) float32 -> (batch, max_K) float32."""
    batch = x.shape[0]
    d_in = 2 * n_obs
    k_pad8 = prepped["w_out_pad"].shape[0]

    # == torch .view(-1, 2*n_obs), then one-time transpose to (d_in, batch).
    inp_t = x.reshape(batch, d_in).T

    # Batch tiling in lane (128) chunks; balanced tiles, and >= 2 grid programs
    # whenever there are >= 2 chunks so the v7x megacore can split the batch.
    n_chunks = pl.cdiv(batch, _LANE)
    n_tiles = max(pl.cdiv(batch, block_b), min(2, n_chunks))
    chunks_per_tile = pl.cdiv(n_chunks, n_tiles)
    tb = chunks_per_tile * _LANE
    n_tiles = pl.cdiv(n_chunks, chunks_per_tile)
    batch_pad = n_tiles * tb

    if batch_pad != batch:
        inp_t = jnp.pad(inp_t, ((0, 0), (0, batch_pad - batch)))
    grid = (n_tiles,)

    const = lambda shape: pl.BlockSpec(shape, lambda i: tuple(0 for _ in shape))

    out_t = pl.pallas_call(
        _model_basic_kernel(n_timesteps),
        out_shape=jax.ShapeDtypeStruct((k_pad8, batch_pad), jnp.float32),
        grid=grid,
        in_specs=[
            pl.BlockSpec((d_in, tb), lambda i: (0, i)),  # inp^T: tiled on batch
            const((n_units, d_in)),                      # weights resident
            const((n_units, 1)),
            const((n_units, n_units)),
            const((n_units, 1)),
            const((k_pad8, n_units)),
            const((k_pad8, 1)),
        ],
        out_specs=pl.BlockSpec((k_pad8, tb), lambda i: (0, i)),
        compiler_params=pltpu.CompilerParams(
            dimension_semantics=("parallel",)),
    )(inp_t, prepped["w_in"], prepped["b_in"], prepped["w_rec"],
      prepped["b_rec"], prepped["w_out_pad"], prepped["b_out_pad"])

    # Slice away sublane/lane padding and transpose back to (batch, max_K).
    return out_t[:max_K, :batch].T


def init_params(key, n_obs, n_units, max_K):
    """Deterministic Xavier-uniform weights, zero biases (matches init_weights)."""
    k1, k2, k3 = jax.random.split(key, 3)

    def xavier(k, fan_out, fan_in):
        limit = jnp.sqrt(6.0 / (fan_in + fan_out))
        return jax.random.uniform(k, (fan_out, fan_in), jnp.float32, -limit, limit)

    return {
        "w_in": xavier(k1, n_units, 2 * n_obs),   # torch Linear weight: (out, in)
        "b_in": jnp.zeros((n_units,), jnp.float32),
        "w_rec": xavier(k2, n_units, n_units),
        "b_rec": jnp.zeros((n_units,), jnp.float32),
        "w_out": xavier(k3, max_K, n_units),
        "b_out": jnp.zeros((max_K,), jnp.float32),
    }


def _reference_forward(x, params, *, n_obs, n_timesteps):
    """Plain-JAX reference mirroring the PyTorch forward."""
    inp = x.reshape(x.shape[0], 2 * n_obs)
    h0 = jnp.tanh(inp @ params["w_in"].T + params["b_in"])
    hidden = h0
    for _ in range(n_timesteps):
        hidden = hidden + jnp.tanh(hidden @ params["w_rec"].T + params["b_rec"]) + h0
    return hidden @ params["w_out"].T + params["b_out"]


if __name__ == "__main__":
    n_obs = 16
    n_units = 32
    n_timesteps = 10
    max_K = 10

    key = jax.random.PRNGKey(0)
    kx, kx2, kp = jax.random.split(key, 3)
    params = init_params(kp, n_obs, n_units, max_K)
    prepped = prepare_params(params, n_obs=n_obs, n_units=n_units, max_K=max_K)

    # Small single-tile case (batch=8 -> one 128-lane tile).
    x = jax.random.normal(kx, (8, 2, n_obs), jnp.float32)
    out = model_basic_forward(
        x, prepped, n_obs=n_obs, n_units=n_units,
        n_timesteps=n_timesteps, max_K=max_K)
    out = jax.block_until_ready(out)
    ref = _reference_forward(x, params, n_obs=n_obs, n_timesteps=n_timesteps)
    assert out.shape == (8, max_K)
    assert jnp.allclose(out, ref, atol=1e-4, rtol=1e-4), "mismatch vs reference (batch=8)"

    # Multi-tile / padded-batch case (batch=200 -> 2 tiles of 128 lanes).
    x2 = jax.random.normal(kx2, (200, 2, n_obs), jnp.float32)
    out2 = model_basic_forward(
        x2, prepped, n_obs=n_obs, n_units=n_units,
        n_timesteps=n_timesteps, max_K=max_K)
    out2 = jax.block_until_ready(out2)
    ref2 = _reference_forward(x2, params, n_obs=n_obs, n_timesteps=n_timesteps)
    assert out2.shape == (200, max_K)
    assert jnp.allclose(out2, ref2, atol=1e-4, rtol=1e-4), "mismatch vs reference (batch=200)"

    print("KERNEL_OK")
</pallas_src>

<mosaic_0001>
module attributes {stable_mosaic.version = 11 : i64} {
  func.func @kernel(%arg0: i32, %arg1: memref<32x128xf32, #tpu.memory_space<vmem>>, %arg2: memref<32x32xf32, #tpu.memory_space<vmem>>, %arg3: memref<32x1xf32, #tpu.memory_space<vmem>>, %arg4: memref<32x32xf32, #tpu.memory_space<vmem>>, %arg5: memref<32x1xf32, #tpu.memory_space<vmem>>, %arg6: memref<16x32xf32, #tpu.memory_space<vmem>>, %arg7: memref<16x1xf32, #tpu.memory_space<vmem>>, %arg8: memref<16x128xf32, #tpu.memory_space<vmem>>) attributes {dimension_semantics = [#tpu.dimension_semantics<parallel>], iteration_bounds = array<i64: 1>, scalar_prefetch = 0 : i64, scratch_operands = 0 : i64, tpu.core_type = #tpu.core_type<tc>, window_params = [{transform_indices = @transform_0, window_bounds = array<i64: 32, 128>}, {pipeline_mode = #tpu.pipeline_mode<synchronous>, transform_indices = @transform_1, window_bounds = array<i64: 32, 32>}, {pipeline_mode = #tpu.pipeline_mode<synchronous>, transform_indices = @transform_2, window_bounds = array<i64: 32, 1>}, {pipeline_mode = #tpu.pipeline_mode<synchronous>, transform_indices = @transform_3, window_bounds = array<i64: 32, 32>}, {pipeline_mode = #tpu.pipeline_mode<synchronous>, transform_indices = @transform_4, window_bounds = array<i64: 32, 1>}, {pipeline_mode = #tpu.pipeline_mode<synchronous>, transform_indices = @transform_5, window_bounds = array<i64: 16, 32>}, {pipeline_mode = #tpu.pipeline_mode<synchronous>, transform_indices = @transform_6, window_bounds = array<i64: 16, 1>}, {transform_indices = @transform_7, window_bounds = array<i64: 16, 128>}]} {
    %c0 = arith.constant 0 : index
    %c0_0 = arith.constant 0 : index
    %0 = vector.load %arg1[%c0, %c0_0] : memref<32x128xf32, #tpu.memory_space<vmem>>, vector<32x128xf32>
    %c0_1 = arith.constant 0 : index
    %c0_2 = arith.constant 0 : index
    %1 = vector.load %arg2[%c0_1, %c0_2] : memref<32x32xf32, #tpu.memory_space<vmem>>, vector<32x32xf32>
    %c0_3 = arith.constant 0 : index
    %c0_4 = arith.constant 0 : index
    %2 = vector.load %arg4[%c0_3, %c0_4] : memref<32x32xf32, #tpu.memory_space<vmem>>, vector<32x32xf32>
    %c0_5 = arith.constant 0 : index
    %c0_6 = arith.constant 0 : index
    %3 = vector.load %arg3[%c0_5, %c0_6] : memref<32x1xf32, #tpu.memory_space<vmem>>, vector<32x1xf32>
    %c0_7 = arith.constant 0 : index
    %c0_8 = arith.constant 0 : index
    %4 = vector.load %arg5[%c0_7, %c0_8] : memref<32x1xf32, #tpu.memory_space<vmem>>, vector<32x1xf32>
    %cst = arith.constant dense<0.000000e+00> : vector<32x128xf32>
    %5 = tpu.matmul %1, %0, %cst {dimension_numbers = #tpu.dot_dimension_numbers<[1], [0], [0], [1], [0, 0, 1, 1], [], []>} : vector<32x32xf32>, vector<32x128xf32>, vector<32x128xf32> -> vector<32x128xf32>
    %6 = vector.broadcast %3 : vector<32x1xf32> to vector<32x128xf32>
    %7 = arith.addf %5, %6 : vector<32x128xf32>
    %8 = math.tanh %7 : vector<32x128xf32>
    %c0_i32 = arith.constant 0 : i32
    %cst_9 = arith.constant dense<0.000000e+00> : vector<32x128xf32>
    %9 = tpu.matmul %2, %8, %cst_9 {dimension_numbers = #tpu.dot_dimension_numbers<[1], [0], [0], [1], [0, 0, 1, 1], [], []>} : vector<32x32xf32>, vector<32x128xf32>, vector<32x128xf32> -> vector<32x128xf32>
    %10 = vector.broadcast %4 : vector<32x1xf32> to vector<32x128xf32>
    %11 = arith.addf %9, %10 : vector<32x128xf32>
    %12 = math.tanh %11 : vector<32x128xf32>
    %13 = arith.addf %8, %12 : vector<32x128xf32>
    %14 = arith.addf %13, %8 : vector<32x128xf32>
    %c1_i32 = arith.constant 1 : i32
    %cst_10 = arith.constant dense<0.000000e+00> : vector<32x128xf32>
    %15 = tpu.matmul %2, %14, %cst_10 {dimension_numbers = #tpu.dot_dimension_numbers<[1], [0], [0], [1], [0, 0, 1, 1], [], []>} : vector<32x32xf32>, vector<32x128xf32>, vector<32x128xf32> -> vector<32x128xf32>
    %16 = vector.broadcast %4 : vector<32x1xf32> to vector<32x128xf32>
    %17 = arith.addf %15, %16 : vector<32x128xf32>
    %18 = math.tanh %17 : vector<32x128xf32>
    %19 = arith.addf %14, %18 : vector<32x128xf32>
    %20 = arith.addf %19, %8 : vector<32x128xf32>
    %c2_i32 = arith.constant 2 : i32
    %cst_11 = arith.constant dense<0.000000e+00> : vector<32x128xf32>
    %21 = tpu.matmul %2, %20, %cst_11 {dimension_numbers = #tpu.dot_dimension_numbers<[1], [0], [0], [1], [0, 0, 1, 1], [], []>} : vector<32x32xf32>, vector<32x128xf32>, vector<32x128xf32> -> vector<32x128xf32>
    %22 = vector.broadcast %4 : vector<32x1xf32> to vector<32x128xf32>
    %23 = arith.addf %21, %22 : vector<32x128xf32>
    %24 = math.tanh %23 : vector<32x128xf32>
    %25 = arith.addf %20, %24 : vector<32x128xf32>
    %26 = arith.addf %25, %8 : vector<32x128xf32>
    %c3_i32 = arith.constant 3 : i32
    %cst_12 = arith.constant dense<0.000000e+00> : vector<32x128xf32>
    %27 = tpu.matmul %2, %26, %cst_12 {dimension_numbers = #tpu.dot_dimension_numbers<[1], [0], [0], [1], [0, 0, 1, 1], [], []>} : vector<32x32xf32>, vector<32x128xf32>, vector<32x128xf32> -> vector<32x128xf32>
    %28 = vector.broadcast %4 : vector<32x1xf32> to vector<32x128xf32>
    %29 = arith.addf %27, %28 : vector<32x128xf32>
    %30 = math.tanh %29 : vector<32x128xf32>
    %31 = arith.addf %26, %30 : vector<32x128xf32>
    %32 = arith.addf %31, %8 : vector<32x128xf32>
    %c4_i32 = arith.constant 4 : i32
    %cst_13 = arith.constant dense<0.000000e+00> : vector<32x128xf32>
    %33 = tpu.matmul %2, %32, %cst_13 {dimension_numbers = #tpu.dot_dimension_numbers<[1], [0], [0], [1], [0, 0, 1, 1], [], []>} : vector<32x32xf32>, vector<32x128xf32>, vector<32x128xf32> -> vector<32x128xf32>
    %34 = vector.broadcast %4 : vector<32x1xf32> to vector<32x128xf32>
    %35 = arith.addf %33, %34 : vector<32x128xf32>
    %36 = math.tanh %35 : vector<32x128xf32>
    %37 = arith.addf %32, %36 : vector<32x128xf32>
    %38 = arith.addf %37, %8 : vector<32x128xf32>
    %c5_i32 = arith.constant 5 : i32
    %cst_14 = arith.constant dense<0.000000e+00> : vector<32x128xf32>
    %39 = tpu.matmul %2, %38, %cst_14 {dimension_numbers = #tpu.dot_dimension_numbers<[1], [0], [0], [1], [0, 0, 1, 1], [], []>} : vector<32x32xf32>, vector<32x128xf32>, vector<32x128xf32> -> vector<32x128xf32>
    %40 = vector.broadcast %4 : vector<32x1xf32> to vector<32x128xf32>
    %41 = arith.addf %39, %40 : vector<32x128xf32>
    %42 = math.tanh %41 : vector<32x128xf32>
    %43 = arith.addf %38, %42 : vector<32x128xf32>
    %44 = arith.addf %43, %8 : vector<32x128xf32>
    %c6_i32 = arith.constant 6 : i32
    %cst_15 = arith.constant dense<0.000000e+00> : vector<32x128xf32>
    %45 = tpu.matmul %2, %44, %cst_15 {dimension_numbers = #tpu.dot_dimension_numbers<[1], [0], [0], [1], [0, 0, 1, 1], [], []>} : vector<32x32xf32>, vector<32x128xf32>, vector<32x128xf32> -> vector<32x128xf32>
    %46 = vector.broadcast %4 : vector<32x1xf32> to vector<32x128xf32>
    %47 = arith.addf %45, %46 : vector<32x128xf32>
    %48 = math.tanh %47 : vector<32x128xf32>
    %49 = arith.addf %44, %48 : vector<32x128xf32>
    %50 = arith.addf %49, %8 : vector<32x128xf32>
    %c7_i32 = arith.constant 7 : i32
    %cst_16 = arith.constant dense<0.000000e+00> : vector<32x128xf32>
    %51 = tpu.matmul %2, %50, %cst_16 {dimension_numbers = #tpu.dot_dimension_numbers<[1], [0], [0], [1], [0, 0, 1, 1], [], []>} : vector<32x32xf32>, vector<32x128xf32>, vector<32x128xf32> -> vector<32x128xf32>
    %52 = vector.broadcast %4 : vector<32x1xf32> to vector<32x128xf32>
    %53 = arith.addf %51, %52 : vector<32x128xf32>
    %54 = math.tanh %53 : vector<32x128xf32>
    %55 = arith.addf %50, %54 : vector<32x128xf32>
    %56 = arith.addf %55, %8 : vector<32x128xf32>
    %c8_i32 = arith.constant 8 : i32
    %cst_17 = arith.constant dense<0.000000e+00> : vector<32x128xf32>
    %57 = tpu.matmul %2, %56, %cst_17 {dimension_numbers = #tpu.dot_dimension_numbers<[1], [0], [0], [1], [0, 0, 1, 1], [], []>} : vector<32x32xf32>, vector<32x128xf32>, vector<32x128xf32> -> vector<32x128xf32>
    %58 = vector.broadcast %4 : vector<32x1xf32> to vector<32x128xf32>
    %59 = arith.addf %57, %58 : vector<32x128xf32>
    %60 = math.tanh %59 : vector<32x128xf32>
    %61 = arith.addf %56, %60 : vector<32x128xf32>
    %62 = arith.addf %61, %8 : vector<32x128xf32>
    %c9_i32 = arith.constant 9 : i32
    %cst_18 = arith.constant dense<0.000000e+00> : vector<32x128xf32>
    %63 = tpu.matmul %2, %62, %cst_18 {dimension_numbers = #tpu.dot_dimension_numbers<[1], [0], [0], [1], [0, 0, 1, 1], [], []>} : vector<32x32xf32>, vector<32x128xf32>, vector<32x128xf32> -> vector<32x128xf32>
    %64 = vector.broadcast %4 : vector<32x1xf32> to vector<32x128xf32>
    %65 = arith.addf %63, %64 : vector<32x128xf32>
    %66 = math.tanh %65 : vector<32x128xf32>
    %67 = arith.addf %62, %66 : vector<32x128xf32>
    %68 = arith.addf %67, %8 : vector<32x128xf32>
    %c0_19 = arith.constant 0 : index
    %c0_20 = arith.constant 0 : index
    %69 = vector.load %arg6[%c0_19, %c0_20] : memref<16x32xf32, #tpu.memory_space<vmem>>, vector<16x32xf32>
    %cst_21 = arith.constant dense<0.000000e+00> : vector<16x128xf32>
    %70 = tpu.matmul %69, %68, %cst_21 {dimension_numbers = #tpu.dot_dimension_numbers<[1], [0], [0], [1], [0, 0, 1, 1], [], []>} : vector<16x32xf32>, vector<32x128xf32>, vector<16x128xf32> -> vector<16x128xf32>
    %c0_22 = arith.constant 0 : index
    %c0_23 = arith.constant 0 : index
    %71 = vector.load %arg7[%c0_22, %c0_23] : memref<16x1xf32, #tpu.memory_space<vmem>>, vector<16x1xf32>
    %72 = vector.broadcast %71 : vector<16x1xf32> to vector<16x128xf32>
    %73 = arith.addf %70, %72 : vector<16x128xf32>
    %c0_24 = arith.constant 0 : index
    %c0_25 = arith.constant 0 : index
    %74 = vector.load %arg8[%c0_24, %c0_25] : memref<16x128xf32, #tpu.memory_space<vmem>>, vector<16x128xf32>
    tpu.vector_store %arg8[%c0_24, %c0_25], %73 {strides = array<i32>} : memref<16x128xf32, #tpu.memory_space<vmem>>, vector<16x128xf32>,
    return
  }
  func.func @transform_0(%arg0: i32) -> (i32, i32) {
    %c0_i32 = arith.constant 0 : i32
    %c0_i32_0 = arith.constant 0 : i32
    return %c0_i32, %arg0 : i32, i32
  }
  func.func @transform_1(%arg0: i32) -> (i32, i32) {
    %c0_i32 = arith.constant 0 : i32
    %c0_i32_0 = arith.constant 0 : i32
    %c0_i32_1 = arith.constant 0 : i32
    return %c0_i32, %c0_i32_0 : i32, i32
  }
  func.func @transform_2(%arg0: i32) -> (i32, i32) {
    %c0_i32 = arith.constant 0 : i32
    %c0_i32_0 = arith.constant 0 : i32
    %c0_i32_1 = arith.constant 0 : i32
    return %c0_i32, %c0_i32_0 : i32, i32
  }
  func.func @transform_3(%arg0: i32) -> (i32, i32) {
    %c0_i32 = arith.constant 0 : i32
    %c0_i32_0 = arith.constant 0 : i32
    %c0_i32_1 = arith.constant 0 : i32
    return %c0_i32, %c0_i32_0 : i32, i32
  }
  func.func @transform_4(%arg0: i32) -> (i32, i32) {
    %c0_i32 = arith.constant 0 : i32
    %c0_i32_0 = arith.constant 0 : i32
    %c0_i32_1 = arith.constant 0 : i32
    return %c0_i32, %c0_i32_0 : i32, i32
  }
  func.func @transform_5(%arg0: i32) -> (i32, i32) {
    %c0_i32 = arith.constant 0 : i32
    %c0_i32_0 = arith.constant 0 : i32
    %c0_i32_1 = arith.constant 0 : i32
    return %c0_i32, %c0_i32_0 : i32, i32
  }
  func.func @transform_6(%arg0: i32) -> (i32, i32) {
    %c0_i32 = arith.constant 0 : i32
    %c0_i32_0 = arith.constant 0 : i32
    %c0_i32_1 = arith.constant 0 : i32
    return %c0_i32, %c0_i32_0 : i32, i32
  }
  func.func @transform_7(%arg0: i32) -> (i32, i32) {
    %c0_i32 = arith.constant 0 : i32
    %c0_i32_0 = arith.constant 0 : i32
    return %c0_i32, %arg0 : i32, i32
  }
}

</mosaic_0001>

<llo_original>
// kernel: model_basic_forward.1
$region0: #{model_basic_forward.1}
  #allocation0 [shape = 'u32[]', space=smem, size = 0x4, offset = 0x4, fixed_abs, tag = 'smem constant byte address 0x4 - core index']
  #allocation1 [shape = 'u32[144,128]{1,0:T(1,128)}', space=vmem, size = 0x12000, scoped, tag = 'internal scratch']
  %s0 = inlined_call_operand.vmem [shape: f32[32,128], index: 0, kind: input, shape index: {}]
  %s1 = inlined_call_operand.vmem [shape: f32[32,32], index: 1, kind: input, shape index: {}]
  %s2 = inlined_call_operand.vmem [shape: f32[32,1], index: 2, kind: input, shape index: {}]
  %s3 = inlined_call_operand.vmem [shape: f32[32,32], index: 3, kind: input, shape index: {}]
  %s4 = inlined_call_operand.vmem [shape: f32[32,1], index: 4, kind: input, shape index: {}]
  %s5 = inlined_call_operand.vmem [shape: f32[16,32], index: 5, kind: input, shape index: {}]
  %s6 = inlined_call_operand.vmem [shape: f32[16,1], index: 6, kind: input, shape index: {}]
  %s7 = inlined_call_operand.vmem [shape: f32[16,128], index: 7, kind: output, shape index: {}]
  %s8 = sld [smem:[#allocation0]]
  $region38: #{model_basic_forward.1} parent=0
    _
  %s10 = ssub.s32 1, %s8
  %s11 = scalar_select 0, %s10, %s8
  // Predicated region
  $region2: #{model_basic_forward.1} parent=0 // pred_check
    _
  $region3: #{model_basic_forward.1} parent=0 // pred_check_branch
    %13 = sbr.rel (0) target = $region5
  $region4: #{model_basic_forward.1} parent=0 // pred_region
    _
  $region5: #{model_basic_forward.1} parent=0 // pred_fallthru
    _
  // Predicated region
  $region6: #{model_basic_forward.1} parent=0 // pred_check
    _
  $region7: #{model_basic_forward.1} parent=0 // pred_check_branch
    %15 = sbr.rel (0) target = $region9
  $region8: #{model_basic_forward.1} parent=0 // pred_region
    _
  $region9: #{model_basic_forward.1} parent=0 // pred_fallthru
    _
  // Predicated region
  $region10: #{model_basic_forward.1} parent=0 // pred_check
    _
  $region11: #{model_basic_forward.1} parent=0 // pred_check_branch
    %17 = sbr.rel (0) target = $region13
  $region12: #{model_basic_forward.1} parent=0 // pred_region
    _
  $region13: #{model_basic_forward.1} parent=0 // pred_fallthru
    _
  // Predicated region
  $region14: #{model_basic_forward.1} parent=0 // pred_check
    _
  $region15: #{model_basic_forward.1} parent=0 // pred_check_branch
    %19 = sbr.rel (0) target = $region17
  $region16: #{model_basic_forward.1} parent=0 // pred_region
    _
  $region17: #{model_basic_forward.1} parent=0 // pred_fallthru
    _
  // Predicated region
  $region18: #{model_basic_forward.1} parent=0 // pred_check
    _
  $region19: #{model_basic_forward.1} parent=0 // pred_check_branch
    %21 = sbr.rel (0) target = $region21
  $region20: #{model_basic_forward.1} parent=0 // pred_region
    _
  $region21: #{model_basic_forward.1} parent=0 // pred_fallthru
    _
  // Predicated region
  $region22: #{model_basic_forward.1} parent=0 // pred_check
    _
  $region23: #{model_basic_forward.1} parent=0 // pred_check_branch
    %23 = sbr.rel (0) target = $region25
  $region24: #{model_basic_forward.1} parent=0 // pred_region
    _
  $region25: #{model_basic_forward.1} parent=0 // pred_fallthru
    _
  // Predicated region
  $region26: #{model_basic_forward.1} parent=0 // pred_check
    _
  $region27: #{model_basic_forward.1} parent=0 // pred_check_branch
    %25 = sbr.rel (0) target = $region29
  $region28: #{model_basic_forward.1} parent=0 // pred_region
    _
  $region29: #{model_basic_forward.1} parent=0 // pred_fallthru
    _
  %v26 = vld [vmem:[%s0] sm:$0xff]
  %v27 = vld [vmem:[%s0 + $0x8] sm:$0xff]
  %v28 = vld [vmem:[%s0 + $0x10] sm:$0xff]
  %v29 = vld [vmem:[%s0 + $0x18] sm:$0xff]
  %v30 = vld [vmem:[%s1] sm:$0xff]
  %v31 = vld [vmem:[%s1 + $0x8] sm:$0xff]
  %v32 = vld [vmem:[%s1 + $0x10] sm:$0xff]
  %v33 = vld [vmem:[%s1 + $0x18] sm:$0xff]
  %v34 = vld [vmem:[%s3] sm:$0xff]
  %v35 = vld [vmem:[%s3 + $0x8] sm:$0xff]
  %v36 = vld [vmem:[%s3 + $0x10] sm:$0xff]
  %v37 = vld [vmem:[%s3 + $0x18] sm:$0xff]
  %v38 = vld [vmem:[%s2] sm:$0xff]
  %v39 = vld [vmem:[%s2 + $0x8] sm:$0xff]
  %v40 = vld [vmem:[%s2 + $0x10] sm:$0xff]
  %v41 = vld [vmem:[%s2 + $0x18] sm:$0xff]
  %v42 = vld [vmem:[%s4] sm:$0xff]
  %v43 = vld [vmem:[%s4 + $0x8] sm:$0xff]
  %v44 = vld [vmem:[%s4 + $0x10] sm:$0xff]
  %v45 = vld [vmem:[%s4 + $0x18] sm:$0xff]
  %47 = vset.pattern.permute.xlu0 0
  %48 = vperm.xlu0 %47, %v38
  %v49 = vpop.permute.xlu0 %48
  %52 = vset.pattern.permute.xlu0 0
  %53 = vperm.xlu0 %52, %v39
  %v54 = vpop.permute.xlu0 %53
  %57 = vset.pattern.permute.xlu0 0
  %58 = vperm.xlu0 %57, %v40
  %v59 = vpop.permute.xlu0 %58
  %62 = vset.pattern.permute.xlu0 0
  %63 = vperm.xlu0 %62, %v41
  %v64 = vpop.permute.xlu0 %63
  %vm66 = vcmask 261120
  %v68 = vsel %vm66, %v30, 0
  %v71 = vsel %vm66, %v31, 0
  %v74 = vsel %vm66, %v32, 0
  %v77 = vsel %vm66, %v33, 0
  %79 = vmatprep.subr.mxu0 0.0
  %80 = vmatpush1.msra.mxu0 %v26
  %81 = vmatprep.subr.mxu0 0.0
  %82 = vmatpush1.msra.mxu0 %v27
  %83 = vmatprep.subr.mxu0 0.0
  %84 = vmatpush1.msra.mxu0 %v28
  %85 = vmatprep.subr.mxu0 0.0
  %86 = vmatpush1.msra.mxu0 %v29
  %87 = vmatprep.subr.mxu0 0.0
  %88 = vmatpush1.msra.mxu0 0.0
  %89 = vmatprep.subr.mxu0 0.0
  %90 = vmatpush1.msra.mxu0 0.0
  %91 = vmatprep.subr.mxu0 0.0
  %92 = vmatpush1.msra.mxu0 0.0
  %93 = vmatprep.subr.mxu0 0.0
  %94 = vmatpush1.msra.mxu0 0.0
  %95 = vmatprep.subr.mxu0 0.0
  %96 = vmatpush1.msra.mxu0 0.0
  %97 = vmatprep.subr.mxu0 0.0
  %98 = vmatpush1.msra.mxu0 0.0
  %99 = vmatprep.subr.mxu0 0.0
  %100 = vmatpush1.msra.mxu0 0.0
  %101 = vmatprep.subr.mxu0 0.0
  %102 = vmatpush1.msra.mxu0 0.0
  %103 = vmatprep.subr.mxu0 0.0
  %104 = vmatpush1.msra.mxu0 0.0
  %105 = vmatprep.subr.mxu0 0.0
  %106 = vmatpush1.msra.mxu0 0.0
  %107 = vmatprep.subr.mxu0 0.0
  %108 = vmatpush1.msra.mxu0 0.0
  %109 = vmatprep.subr.mxu0 0.0
  %110 = vmatpush1.msra.mxu0 0.0
  %111 = vmatprep.subr.mxu0 0.0
  %112 = vmatpush1.msra.mxu0 0.0
  %113 = vmatprep.subr.mxu0 0.0
  %114 = vmatpush1.msra.mxu0 0.0
  %115 = vmatprep.subr.mxu0 0.0
  %116 = vmatpush1.msra.mxu0 0.0
  %117 = vmatprep.subr.mxu0 0.0
  %118 = vmatpush1.msra.mxu0 0.0
  %119 = vmatprep.subr.mxu0 0.0
  %120 = vmatpush1.msra.mxu0 0.0
  %121 = vmatprep.subr.mxu0 0.0
  %122 = vmatpush1.msra.mxu0 0.0
  %123 = vmatprep.subr.mxu0 0.0
  %124 = vmatpush1.msra.mxu0 0.0
  %125 = vmatprep.subr.mxu0 0.0
  %126 = vmatpush1.msra.mxu0 0.0
  %127 = vmatprep.subr.mxu0 0.0
  %128 = vmatpush1.msra.mxu0 0.0
  %129 = vmatprep.subr.mxu0 0.0
  %130 = vmatpush1.msra.mxu0 0.0
  %131 = vmatprep.subr.mxu0 0.0
  %132 = vmatpush1.msra.mxu0 0.0
  %133 = vmatprep.subr.mxu0 0.0
  %134 = vmatpush1.msra.mxu0 0.0
  %135 = vmatprep.subr.mxu0 0.0
  %136 = vmatpush1.msra.mxu0 0.0
  %137 = vmatprep.subr.mxu0 0.0
  %138 = vmatpush1.msra.mxu0 0.0
  %139 = vmatprep.subr.mxu0 0.0
  %140 = vmatpush1.msra.mxu0 0.0
  %141 = vmatprep.subr.mxu0 0.0
  %142 = vmatpush1.msra.mxu0 0.0
  %143 = vmatprep.mubr.f32.mxu0 0.0
  %144 = vmatmul.mubr.f32.gmra.mrb[0].mxu0 %v68
  %v145 = vpop.f32.mrb[0].mxu0
  %v146 = vadd.f32 %v49, %v145
  %v147 = vpop.f32.mrb[0].mxu0
  %148 = vmatprep.mubr.f32.mxu0 0.0
  %149 = vmatmul.mubr.f32.gmra.mrb[0].mxu0 %v71
  %v150 = vpop.f32.mrb[0].mxu0
  %v151 = vadd.f32 %v54, %v150
  %v152 = vpop.f32.mrb[0].mxu0
  %153 = vmatprep.mubr.f32.mxu0 0.0
  %154 = vmatmul.mubr.f32.gmra.mrb[0].mxu0 %v74
  %v155 = vpop.f32.mrb[0].mxu0
  %v156 = vadd.f32 %v59, %v155
  %v157 = vpop.f32.mrb[0].mxu0
  %158 = vmatprep.mubr.f32.mxu0 0.0
  %159 = vmatmul.mubr.f32.gmra.mrb[0].mxu0 %v77
  %v160 = vpop.f32.mrb[0].mxu0
  %v161 = vadd.f32 %v64, %v160
  %v162 = vpop.f32.mrb[0].mxu0
  %163 = vdwg.mxu0
  %v164 = vtanh.pop %v146
  %v165 = vtanh.pop %v151
  %v166 = vtanh.pop %v156
  %v167 = vtanh.pop %v161
  %169 = vset.pattern.permute.xlu0 0
  %170 = vperm.xlu0 %169, %v42
  %v171 = vpop.permute.xlu0 %170
  %174 = vset.pattern.permute.xlu0 0
  %175 = vperm.xlu0 %174, %v43
  %v176 = vpop.permute.xlu0 %175
  %179 = vset.pattern.permute.xlu0 0
  %180 = vperm.xlu0 %179, %v44
  %v181 = vpop.permute.xlu0 %180
  %184 = vset.pattern.permute.xlu0 0
  %185 = vperm.xlu0 %184, %v45
  %v186 = vpop.permute.xlu0 %185
  %v189 = vsel %vm66, %v34, 0
  %v192 = vsel %vm66, %v35, 0
  %v195 = vsel %vm66, %v36, 0
  %v198 = vsel %vm66, %v37, 0
  %200 = vmatprep.subr.mxu0 0.0
  %201 = vmatpush1.msra.mxu0 %v164
  %202 = vmatprep.subr.mxu0 0.0
  %203 = vmatpush1.msra.mxu0 %v165
  %204 = vmatprep.subr.mxu0 0.0
  %205 = vmatpush1.msra.mxu0 %v166
  %206 = vmatprep.subr.mxu0 0.0
  %207 = vmatpush1.msra.mxu0 %v167
  %208 = vmatprep.subr.mxu0 0.0
  %209 = vmatpush1.msra.mxu0 0.0
  %210 = vmatprep.subr.mxu0 0.0
  %211 = vmatpush1.msra.mxu0 0.0
  %212 = vmatprep.subr.mxu0 0.0
  %213 = vmatpush1.msra.mxu0 0.0
  %214 = vmatprep.subr.mxu0 0.0
  %215 = vmatpush1.msra.mxu0 0.0
  %216 = vmatprep.subr.mxu0 0.0
  %217 = vmatpush1.msra.mxu0 0.0
  %218 = vmatprep.subr.mxu0 0.0
  %219 = vmatpush1.msra.mxu0 0.0
  %220 = vmatprep.subr.mxu0 0.0
  %221 = vmatpush1.msra.mxu0 0.0
  %222 = vmatprep.subr.mxu0 0.0
  %223 = vmatpush1.msra.mxu0 0.0
  %224 = vmatprep.subr.mxu0 0.0
  %225 = vmatpush1.msra.mxu0 0.0
  %226 = vmatprep.subr.mxu0 0.0
  %227 = vmatpush1.msra.mxu0 0.0
  %228 = vmatprep.subr.mxu0 0.0
  %229 = vmatpush1.msra.mxu0 0.0
  %230 = vmatprep.subr.mxu0 0.0
  %231 = vmatpush1.msra.mxu0 0.0
  %232 = vmatprep.subr.mxu0 0.0
  %233 = vmatpush1.msra.mxu0 0.0
  %234 = vmatprep.subr.mxu0 0.0
  %235 = vmatpush1.msra.mxu0 0.0
  %236 = vmatprep.subr.mxu0 0.0
  %237 = vmatpush1.msra.mxu0 0.0
  %238 = vmatprep.subr.mxu0 0.0
  %239 = vmatpush1.msra.mxu0 0.0
  %240 = vmatprep.subr.mxu0 0.0
  %241 = vmatpush1.msra.mxu0 0.0
  %242 = vmatprep.subr.mxu0 0.0
  %243 = vmatpush1.msra.mxu0 0.0
  %244 = vmatprep.subr.mxu0 0.0
  %245 = vmatpush1.msra.mxu0 0.0
  %246 = vmatprep.subr.mxu0 0.0
  %247 = vmatpush1.msra.mxu0 0.0
  %248 = vmatprep.subr.mxu0 0.0
  %249 = vmatpush1.msra.mxu0 0.0
  %250 = vmatprep.subr.mxu0 0.0
  %251 = vmatpush1.msra.mxu0 0.0
  %252 = vmatprep.subr.mxu0 0.0
  %253 = vmatpush1.msra.mxu0 0.0
  %254 = vmatprep.subr.mxu0 0.0
  %255 = vmatpush1.msra.mxu0 0.0
  %256 = vmatprep.subr.mxu0 0.0
  %257 = vmatpush1.msra.mxu0 0.0
  %258 = vmatprep.subr.mxu0 0.0
  %259 = vmatpush1.msra.mxu0 0.0
  %260 = vmatprep.subr.mxu0 0.0
  %261 = vmatpush1.msra.mxu0 0.0
  %262 = vmatprep.subr.mxu0 0.0
  %263 = vmatpush1.msra.mxu0 0.0
  %264 = vmatprep.mubr.f32.mxu0 0.0
  %265 = vmatmul.mubr.f32.gmra.mrb[0].mxu0 %v189
  %v266 = vpop.f32.mrb[0].mxu0
  %v267 = vadd.f32 %v171, %v266
  %v268 = vpop.f32.mrb[0].mxu0
  %269 = vmatprep.mubr.f32.mxu0 0.0
  %270 = vmatmul.mubr.f32.gmra.mrb[0].mxu0 %v192
  %v271 = vpop.f32.mrb[0].mxu0
  %v272 = vadd.f32 %v176, %v271
  %v273 = vpop.f32.mrb[0].mxu0
  %274 = vmatprep.mubr.f32.mxu0 0.0
  %275 = vmatmul.mubr.f32.gmra.mrb[0].mxu0 %v195
  %v276 = vpop.f32.mrb[0].mxu0
  %v277 = vadd.f32 %v181, %v276
  %v278 = vpop.f32.mrb[0].mxu0
  %279 = vmatprep.mubr.f32.mxu0 0.0
  %280 = vmatmul.mubr.f32.gmra.mrb[0].mxu0 %v198
  %v281 = vpop.f32.mrb[0].mxu0
  %v282 = vadd.f32 %v186, %v281
  %v283 = vpop.f32.mrb[0].mxu0
  %284 = vdwg.mxu0
  %v285 = vtanh.pop %v267
  %v286 = vtanh.pop %v272
  %v287 = vtanh.pop %v277
  %v288 = vtanh.pop %v282
  %v289 = vadd.f32 %v164, %v285
  %v290 = vadd.f32 %v165, %v286
  %v291 = vadd.f32 %v166, %v287
  %v292 = vadd.f32 %v167, %v288
  %v293 = vadd.f32 %v289, %v164
  %v294 = vadd.f32 %v290, %v165
  %v295 = vadd.f32 %v291, %v166
  %v296 = vadd.f32 %v292, %v167
  %297 = vmatprep.subr.mxu0 0.0
  %298 = vmatpush1.msra.mxu0 %v293
  %299 = vmatprep.subr.mxu0 0.0
  %300 = vmatpush1.msra.mxu0 %v294
  %301 = vmatprep.subr.mxu0 0.0
  %302 = vmatpush1.msra.mxu0 %v295
  %303 = vmatprep.subr.mxu0 0.0
  %304 = vmatpush1.msra.mxu0 %v296
  %305 = vmatprep.subr.mxu0 0.0
  %306 = vmatpush1.msra.mxu0 0.0
  %307 = vmatprep.subr.mxu0 0.0
  %308 = vmatpush1.msra.mxu0 0.0
  %309 = vmatprep.subr.mxu0 0.0
  %310 = vmatpush1.msra.mxu0 0.0
  %311 = vmatprep.subr.mxu0 0.0
  %312 = vmatpush1.msra.mxu0 0.0
  %313 = vmatprep.subr.mxu0 0.0
  %314 = vmatpush1.msra.mxu0 0.0
  %315 = vmatprep.subr.mxu0 0.0
  %316 = vmatpush1.msra.mxu0 0.0
  %317 = vmatprep.subr.mxu0 0.0
  %318 = vmatpush1.msra.mxu0 0.0
  %319 = vmatprep.subr.mxu0 0.0
  %320 = vmatpush1.msra.mxu0 0.0
  %321 = vmatprep.subr.mxu0 0.0
  %322 = vmatpush1.msra.mxu0 0.0
  %323 = vmatprep.subr.mxu0 0.0
  %324 = vmatpush1.msra.mxu0 0.0
  %325 = vmatprep.subr.mxu0 0.0
  %326 = vmatpush1.msra.mxu0 0.0
  %327 = vmatprep.subr.mxu0 0.0
  %328 = vmatpush1.msra.mxu0 0.0
  %329 = vmatprep.subr.mxu0 0.0
  %330 = vmatpush1.msra.mxu0 0.0
  %331 = vmatprep.subr.mxu0 0.0
  %332 = vmatpush1.msra.mxu0 0.0
  %333 = vmatprep.subr.mxu0 0.0
  %334 = vmatpush1.msra.mxu0 0.0
  %335 = vmatprep.subr.mxu0 0.0
  %336 = vmatpush1.msra.mxu0 0.0
  %337 = vmatprep.subr.mxu0 0.0
  %338 = vmatpush1.msra.mxu0 0.0
  %339 = vmatprep.subr.mxu0 0.0
  %340 = vmatpush1.msra.mxu0 0.0
  %341 = vmatprep.subr.mxu0 0.0
  %342 = vmatpush1.msra.mxu0 0.0
  %343 = vmatprep.subr.mxu0 0.0
  %344 = vmatpush1.msra.mxu0 0.0
  %345 = vmatprep.subr.mxu0 0.0
  %346 = vmatpush1.msra.mxu0 0.0
  %347 = vmatprep.subr.mxu0 0.0
  %348 = vmatpush1.msra.mxu0 0.0
  %349 = vmatprep.subr.mxu0 0.0
  %350 = vmatpush1.msra.mxu0 0.0
  %351 = vmatprep.subr.mxu0 0.0
  %352 = vmatpush1.msra.mxu0 0.0
  %353 = vmatprep.subr.mxu0 0.0
  %354 = vmatpush1.msra.mxu0 0.0
  %355 = vmatprep.subr.mxu0 0.0
  %356 = vmatpush1.msra.mxu0 0.0
  %357 = vmatprep.subr.mxu0 0.0
  %358 = vmatpush1.msra.mxu0 0.0
  %359 = vmatprep.subr.mxu0 0.0
  %360 = vmatpush1.msra.mxu0 0.0
  %361 = vmatprep.mubr.f32.mxu0 0.0
  %362 = vmatmul.mubr.f32.gmra.mrb[0].mxu0 %v189
  %v363 = vpop.f32.mrb[0].mxu0
  %v364 = vadd.f32 %v171, %v363
  %v365 = vpop.f32.mrb[0].mxu0
  %366 = vmatprep.mubr.f32.mxu0 0.0
  %367 = vmatmul.mubr.f32.gmra.mrb[0].mxu0 %v192
  %v368 = vpop.f32.mrb[0].mxu0
  %v369 = vadd.f32 %v176, %v368
  %v370 = vpop.f32.mrb[0].mxu0
  %371 = vmatprep.mubr.f32.mxu0 0.0
  %372 = vmatmul.mubr.f32.gmra.mrb[0].mxu0 %v195
  %v373 = vpop.f32.mrb[0].mxu0
  %v374 = vadd.f32 %v181, %v373
  %v375 = vpop.f32.mrb[0].mxu0
  %376 = vmatprep.mubr.f32.mxu0 0.0
  %377 = vmatmul.mubr.f32.gmra.mrb[0].mxu0 %v198
  %v378 = vpop.f32.mrb[0].mxu0
  %v379 = vadd.f32 %v186, %v378
  %v380 = vpop.f32.mrb[0].mxu0
  %381 = vdwg.mxu0
  %v382 = vtanh.pop %v364
  %v383 = vtanh.pop %v369
  %v384 = vtanh.pop %v374
  %v385 = vtanh.pop %v379
  %v386 = vadd.f32 %v293, %v382
  %v387 = vadd.f32 %v294, %v383
  %v388 = vadd.f32 %v295, %v384
  %v389 = vadd.f32 %v296, %v385
  %v390 = vadd.f32 %v386, %v164
  %v391 = vadd.f32 %v387, %v165
  %v392 = vadd.f32 %v388, %v166
  %v393 = vadd.f32 %v389, %v167
  %394 = vmatprep.subr.mxu0 0.0
  %395 = vmatpush1.msra.mxu0 %v390
  %396 = vmatprep.subr.mxu0 0.0
  %397 = vmatpush1.msra.mxu0 %v391
  %398 = vmatprep.subr.mxu0 0.0
  %399 = vmatpush1.msra.mxu0 %v392
  %400 = vmatprep.subr.mxu0 0.0
  %401 = vmatpush1.msra.mxu0 %v393
  %402 = vmatprep.subr.mxu0 0.0
  %403 = vmatpush1.msra.mxu0 0.0
  %404 = vmatprep.subr.mxu0 0.0
  %405 = vmatpush1.msra.mxu0 0.0
  %406 = vmatprep.subr.mxu0 0.0
  %407 = vmatpush1.msra.mxu0 0.0
  %408 = vmatprep.subr.mxu0 0.0
  %409 = vmatpush1.msra.mxu0 0.0
  %410 = vmatprep.subr.mxu0 0.0
  %411 = vmatpush1.msra.mxu0 0.0
  %412 = vmatprep.subr.mxu0 0.0
  %413 = vmatpush1.msra.mxu0 0.0
  %414 = vmatprep.subr.mxu0 0.0
  %415 = vmatpush1.msra.mxu0 0.0
  %416 = vmatprep.subr.mxu0 0.0
  %417 = vmatpush1.msra.mxu0 0.0
  %418 = vmatprep.subr.mxu0 0.0
  %419 = vmatpush1.msra.mxu0 0.0
  %420 = vmatprep.subr.mxu0 0.0
  %421 = vmatpush1.msra.mxu0 0.0
  %422 = vmatprep.subr.mxu0 0.0
  %423 = vmatpush1.msra.mxu0 0.0
  %424 = vmatprep.subr.mxu0 0.0
  %425 = vmatpush1.msra.mxu0 0.0
  %426 = vmatprep.subr.mxu0 0.0
  %427 = vmatpush1.msra.mxu0 0.0
  %428 = vmatprep.subr.mxu0 0.0
  %429 = vmatpush1.msra.mxu0 0.0
  %430 = vmatprep.subr.mxu0 0.0
  %431 = vmatpush1.msra.mxu0 0.0
  %432 = vmatprep.subr.mxu0 0.0
  %433 = vmatpush1.msra.mxu0 0.0
  %434 = vmatprep.subr.mxu0 0.0
  %435 = vmatpush1.msra.mxu0 0.0
  %436 = vmatprep.subr.mxu0 0.0
  %437 = vmatpush1.msra.mxu0 0.0
  %438 = vmatprep.subr.mxu0 0.0
  %439 = vmatpush1.msra.mxu0 0.0
  %440 = vmatprep.subr.mxu0 0.0
  %441 = vmatpush1.msra.mxu0 0.0
  %442 = vmatprep.subr.mxu0 0.0
  %443 = vmatpush1.msra.mxu0 0.0
  %444 = vmatprep.subr.mxu0 0.0
  %445 = vmatpush1.msra.mxu0 0.0
  %446 = vmatprep.subr.mxu0 0.0
  %447 = vmatpush1.msra.mxu0 0.0
  %448 = vmatprep.subr.mxu0 0.0
  %449 = vmatpush1.msra.mxu0 0.0
  %450 = vmatprep.subr.mxu0 0.0
  %451 = vmatpush1.msra.mxu0 0.0
  %452 = vmatprep.subr.mxu0 0.0
  %453 = vmatpush1.msra.mxu0 0.0
  %454 = vmatprep.subr.mxu0 0.0
  %455 = vmatpush1.msra.mxu0 0.0
  %456 = vmatprep.subr.mxu0 0.0
  %457 = vmatpush1.msra.mxu0 0.0
  %458 = vmatprep.mubr.f32.mxu0 0.0
  %459 = vmatmul.mubr.f32.gmra.mrb[0].mxu0 %v189
  %v460 = vpop.f32.mrb[0].mxu0
  %v461 = vadd.f32 %v171, %v460
  %v462 = vpop.f32.mrb[0].mxu0
  %463 = vmatprep.mubr.f32.mxu0 0.0
  %464 = vmatmul.mubr.f32.gmra.mrb[0].mxu0 %v192
  %v465 = vpop.f32.mrb[0].mxu0
  %v466 = vadd.f32 %v176, %v465
  %v467 = vpop.f32.mrb[0].mxu0
  %468 = vmatprep.mubr.f32.mxu0 0.0
  %469 = vmatmul.mubr.f32.gmra.mrb[0].mxu0 %v195
  %v470 = vpop.f32.mrb[0].mxu0
  %v471 = vadd.f32 %v181, %v470
  %v472 = vpop.f32.mrb[0].mxu0
  %473 = vmatprep.mubr.f32.mxu0 0.0
  %474 = vmatmul.mubr.f32.gmra.mrb[0].mxu0 %v198
  %v475 = vpop.f32.mrb[0].mxu0
  %v476 = vadd.f32 %v186, %v475
  %v477 = vpop.f32.mrb[0].mxu0
  %478 = vdwg.mxu0
  %v479 = vtanh.pop %v461
  %v480 = vtanh.pop %v466
  %v481 = vtanh.pop %v471
  %v482 = vtanh.pop %v476
  %v483 = vadd.f32 %v390, %v479
  %v484 = vadd.f32 %v391, %v480
  %v485 = vadd.f32 %v392, %v481
  %v486 = vadd.f32 %v393, %v482
  %v487 = vadd.f32 %v483, %v164
  %v488 = vadd.f32 %v484, %v165
  %v489 = vadd.f32 %v485, %v166
  %v490 = vadd.f32 %v486, %v167
  %491 = vmatprep.subr.mxu0 0.0
  %492 = vmatpush1.msra.mxu0 %v487
  %493 = vmatprep.subr.mxu0 0.0
  %494 = vmatpush1.msra.mxu0 %v488
  %495 = vmatprep.subr.mxu0 0.0
  %496 = vmatpush1.msra.mxu0 %v489
  %497 = vmatprep.subr.mxu0 0.0
  %498 = vmatpush1.msra.mxu0 %v490
  %499 = vmatprep.subr.mxu0 0.0
  %500 = vmatpush1.msra.mxu0 0.0
  %501 = vmatprep.subr.mxu0 0.0
  %502 = vmatpush1.msra.mxu0 0.0
  %503 = vmatprep.subr.mxu0 0.0
  %504 = vmatpush1.msra.mxu0 0.0
  %505 = vmatprep.subr.mxu0 0.0
  %506 = vmatpush1.msra.mxu0 0.0
  %507 = vmatprep.subr.mxu0 0.0
  %508 = vmatpush1.msra.mxu0 0.0
  %509 = vmatprep.subr.mxu0 0.0
  %510 = vmatpush1.msra.mxu0 0.0
  %511 = vmatprep.subr.mxu0 0.0
  %512 = vmatpush1.msra.mxu0 0.0
  %513 = vmatprep.subr.mxu0 0.0
  %514 = vmatpush1.msra.mxu0 0.0
  %515 = vmatprep.subr.mxu0 0.0
  %516 = vmatpush1.msra.mxu0 0.0
  %517 = vmatprep.subr.mxu0 0.0
  %518 = vmatpush1.msra.mxu0 0.0
  %519 = vmatprep.subr.mxu0 0.0
  %520 = vmatpush1.msra.mxu0 0.0
  %521 = vmatprep.subr.mxu0 0.0
  %522 = vmatpush1.msra.mxu0 0.0
  %523 = vmatprep.subr.mxu0 0.0
  %524 = vmatpush1.msra.mxu0 0.0
  %525 = vmatprep.subr.mxu0 0.0
  %526 = vmatpush1.msra.mxu0 0.0
  %527 = vmatprep.subr.mxu0 0.0
  %528 = vmatpush1.msra.mxu0 0.0
  %529 = vmatprep.subr.mxu0 0.0
  %530 = vmatpush1.msra.mxu0 0.0
  %531 = vmatprep.subr.mxu0 0.0
  %532 = vmatpush1.msra.mxu0 0.0
  %533 = vmatprep.subr.mxu0 0.0
  %534 = vmatpush1.msra.mxu0 0.0
  %535 = vmatprep.subr.mxu0 0.0
  %536 = vmatpush1.msra.mxu0 0.0
  %537 = vmatprep.subr.mxu0 0.0
  %538 = vmatpush1.msra.mxu0 0.0
  %539 = vmatprep.subr.mxu0 0.0
  %540 = vmatpush1.msra.mxu0 0.0
  %541 = vmatprep.subr.mxu0 0.0
  %542 = vmatpush1.msra.mxu0 0.0
  %543 = vmatprep.subr.mxu0 0.0
  %544 = vmatpush1.msra.mxu0 0.0
  %545 = vmatprep.subr.mxu0 0.0
  %546 = vmatpush1.msra.mxu0 0.0
  %547 = vmatprep.subr.mxu0 0.0
  %548 = vmatpush1.msra.mxu0 0.0
  %549 = vmatprep.subr.mxu0 0.0
  %550 = vmatpush1.msra.mxu0 0.0
  %551 = vmatprep.subr.mxu0 0.0
  %552 = vmatpush1.msra.mxu0 0.0
  %553 = vmatprep.subr.mxu0 0.0
  %554 = vmatpush1.msra.mxu0 0.0
  %555 = vmatprep.mubr.f32.mxu0 0.0
  %556 = vmatmul.mubr.f32.gmra.mrb[0].mxu0 %v189
  %v557 = vpop.f32.mrb[0].mxu0
  %v558 = vadd.f32 %v171, %v557
  %v559 = vpop.f32.mrb[0].mxu0
  %560 = vmatprep.mubr.f32.mxu0 0.0
  %561 = vmatmul.mubr.f32.gmra.mrb[0].mxu0 %v192
  %v562 = vpop.f32.mrb[0].mxu0
  %v563 = vadd.f32 %v176, %v562
  %v564 = vpop.f32.mrb[0].mxu0
  %565 = vmatprep.mubr.f32.mxu0 0.0
  %566 = vmatmul.mubr.f32.gmra.mrb[0].mxu0 %v195
  %v567 = vpop.f32.mrb[0].mxu0
  %v568 = vadd.f32 %v181, %v567
  %v569 = vpop.f32.mrb[0].mxu0
  %570 = vmatprep.mubr.f32.mxu0 0.0
  %571 = vmatmul.mubr.f32.gmra.mrb[0].mxu0 %v198
  %v572 = vpop.f32.mrb[0].mxu0
  %v573 = vadd.f32 %v186, %v572
  %v574 = vpop.f32.mrb[0].mxu0
  %575 = vdwg.mxu0
  %v576 = vtanh.pop %v558
  %v577 = vtanh.pop %v563
  %v578 = vtanh.pop %v568
  %v579 = vtanh.pop %v573
  %v580 = vadd.f32 %v487, %v576
  %v581 = vadd.f32 %v488, %v577
  %v582 = vadd.f32 %v489, %v578
  %v583 = vadd.f32 %v490, %v579
  %v584 = vadd.f32 %v580, %v164
  %v585 = vadd.f32 %v581, %v165
  %v586 = vadd.f32 %v582, %v166
  %v587 = vadd.f32 %v583, %v167
  %588 = vmatprep.subr.mxu0 0.0
  %589 = vmatpush1.msra.mxu0 %v584
  %590 = vmatprep.subr.mxu0 0.0
  %591 = vmatpush1.msra.mxu0 %v585
  %592 = vmatprep.subr.mxu0 0.0
  %593 = vmatpush1.msra.mxu0 %v586
  %594 = vmatprep.subr.mxu0 0.0
  %595 = vmatpush1.msra.mxu0 %v587
  %596 = vmatprep.subr.mxu0 0.0
  %597 = vmatpush1.msra.mxu0 0.0
  %598 = vmatprep.subr.mxu0 0.0
  %599 = vmatpush1.msra.mxu0 0.0
  %600 = vmatprep.subr.mxu0 0.0
  %601 = vmatpush1.msra.mxu0 0.0
  %602 = vmatprep.subr.mxu0 0.0
  %603 = vmatpush1.msra.mxu0 0.0
  %604 = vmatprep.subr.mxu0 0.0
  %605 = vmatpush1.msra.mxu0 0.0
  %606 = vmatprep.subr.mxu0 0.0
  %607 = vmatpush1.msra.mxu0 0.0
  %608 = vmatprep.subr.mxu0 0.0
  %609 = vmatpush1.msra.mxu0 0.0
  %610 = vmatprep.subr.mxu0 0.0
  %611 = vmatpush1.msra.mxu0 0.0
  %612 = vmatprep.subr.mxu0 0.0
  %613 = vmatpush1.msra.mxu0 0.0
  %614 = vmatprep.subr.mxu0 0.0
  %615 = vmatpush1.msra.mxu0 0.0
  %616 = vmatprep.subr.mxu0 0.0
  %617 = vmatpush1.msra.mxu0 0.0
  %618 = vmatprep.subr.mxu0 0.0
  %619 = vmatpush1.msra.mxu0 0.0
  %620 = vmatprep.subr.mxu0 0.0
  %621 = vmatpush1.msra.mxu0 0.0
  %622 = vmatprep.subr.mxu0 0.0
  %623 = vmatpush1.msra.mxu0 0.0
  %624 = vmatprep.subr.mxu0 0.0
  %625 = vmatpush1.msra.mxu0 0.0
  %626 = vmatprep.subr.mxu0 0.0
  %627 = vmatpush1.msra.mxu0 0.0
  %628 = vmatprep.subr.mxu0 0.0
  %629 = vmatpush1.msra.mxu0 0.0
  %630 = vmatprep.subr.mxu0 0.0
  %631 = vmatpush1.msra.mxu0 0.0
  %632 = vmatprep.subr.mxu0 0.0
  %633 = vmatpush1.msra.mxu0 0.0
  %634 = vmatprep.subr.mxu0 0.0
  %635 = vmatpush1.msra.mxu0 0.0
  %636 = vmatprep.subr.mxu0 0.0
  %637 = vmatpush1.msra.mxu0 0.0
  %638 = vmatprep.subr.mxu0 0.0
  %639 = vmatpush1.msra.mxu0 0.0
  %640 = vmatprep.subr.mxu0 0.0
  %641 = vmatpush1.msra.mxu0 0.0
  %642 = vmatprep.subr.mxu0 0.0
  %643 = vmatpush1.msra.mxu0 0.0
  %644 = vmatprep.subr.mxu0 0.0
  %645 = vmatpush1.msra.mxu0 0.0
  %646 = vmatprep.subr.mxu0 0.0
  %647 = vmatpush1.msra.mxu0 0.0
  %648 = vmatprep.subr.mxu0 0.0
  %649 = vmatpush1.msra.mxu0 0.0
  %650 = vmatprep.subr.mxu0 0.0
  %651 = vmatpush1.msra.mxu0 0.0
  %652 = vmatprep.mubr.f32.mxu0 0.0
  %653 = vmatmul.mubr.f32.gmra.mrb[0].mxu0 %v189
  %v654 = vpop.f32.mrb[0].mxu0
  %v655 = vadd.f32 %v171, %v654
  %v656 = vpop.f32.mrb[0].mxu0
  %657 = vmatprep.mubr.f32.mxu0 0.0
  %658 = vmatmul.mubr.f32.gmra.mrb[0].mxu0 %v192
  %v659 = vpop.f32.mrb[0].mxu0
  %v660 = vadd.f32 %v176, %v659
  %v661 = vpop.f32.mrb[0].mxu0
  %662 = vmatprep.mubr.f32.mxu0 0.0
  %663 = vmatmul.mubr.f32.gmra.mrb[0].mxu0 %v195
  %v664 = vpop.f32.mrb[0].mxu0
  %v665 = vadd.f32 %v181, %v664
  %v666 = vpop.f32.mrb[0].mxu0
  %667 = vmatprep.mubr.f32.mxu0 0.0
  %668 = vmatmul.mubr.f32.gmra.mrb[0].mxu0 %v198
  %v669 = vpop.f32.mrb[0].mxu0
  %v670 = vadd.f32 %v186, %v669
  %v671 = vpop.f32.mrb[0].mxu0
  %672 = vdwg.mxu0
  %v673 = vtanh.pop %v655
  %v674 = vtanh.pop %v660
  %v675 = vtanh.pop %v665
  %v676 = vtanh.pop %v670
  %v677 = vadd.f32 %v584, %v673
  %v678 = vadd.f32 %v585, %v674
  %v679 = vadd.f32 %v586, %v675
  %v680 = vadd.f32 %v587, %v676
  %v681 = vadd.f32 %v677, %v164
  %v682 = vadd.f32 %v678, %v165
  %v683 = vadd.f32 %v679, %v166
  %v684 = vadd.f32 %v680, %v167
  %685 = vmatprep.subr.mxu0 0.0
  %686 = vmatpush1.msra.mxu0 %v681
  %687 = vmatprep.subr.mxu0 0.0
  %688 = vmatpush1.msra.mxu0 %v682
  %689 = vmatprep.subr.mxu0 0.0
  %690 = vmatpush1.msra.mxu0 %v683
  %691 = vmatprep.subr.mxu0 0.0
  %692 = vmatpush1.msra.mxu0 %v684
  %693 = vmatprep.subr.mxu0 0.0
  %694 = vmatpush1.msra.mxu0 0.0
  %695 = vmatprep.subr.mxu0 0.0
  %696 = vmatpush1.msra.mxu0 0.0
  %697 = vmatprep.subr.mxu0 0.0
  %698 = vmatpush1.msra.mxu0 0.0
  %699 = vmatprep.subr.mxu0 0.0
  %700 = vmatpush1.msra.mxu0 0.0
  %701 = vmatprep.subr.mxu0 0.0
  %702 = vmatpush1.msra.mxu0 0.0
  %703 = vmatprep.subr.mxu0 0.0
  %704 = vmatpush1.msra.mxu0 0.0
  %705 = vmatprep.subr.mxu0 0.0
  %706 = vmatpush1.msra.mxu0 0.0
  %707 = vmatprep.subr.mxu0 0.0
  %708 = vmatpush1.msra.mxu0 0.0
  %709 = vmatprep.subr.mxu0 0.0
  %710 = vmatpush1.msra.mxu0 0.0
  %711 = vmatprep.subr.mxu0 0.0
  %712 = vmatpush1.msra.mxu0 0.0
  %713 = vmatprep.subr.mxu0 0.0
  %714 = vmatpush1.msra.mxu0 0.0
  %715 = vmatprep.subr.mxu0 0.0
  %716 = vmatpush1.msra.mxu0 0.0
  %717 = vmatprep.subr.mxu0 0.0
  %718 = vmatpush1.msra.mxu0 0.0
  %719 = vmatprep.subr.mxu0 0.0
  %720 = vmatpush1.msra.mxu0 0.0
  %721 = vmatprep.subr.mxu0 0.0
  %722 = vmatpush1.msra.mxu0 0.0
  %723 = vmatprep.subr.mxu0 0.0
  %724 = vmatpush1.msra.mxu0 0.0
  %725 = vmatprep.subr.mxu0 0.0
  %726 = vmatpush1.msra.mxu0 0.0
  %727 = vmatprep.subr.mxu0 0.0
  %728 = vmatpush1.msra.mxu0 0.0
  %729 = vmatprep.subr.mxu0 0.0
  %730 = vmatpush1.msra.mxu0 0.0
  %731 = vmatprep.subr.mxu0 0.0
  %732 = vmatpush1.msra.mxu0 0.0
  %733 = vmatprep.subr.mxu0 0.0
  %734 = vmatpush1.msra.mxu0 0.0
  %735 = vmatprep.subr.mxu0 0.0
  %736 = vmatpush1.msra.mxu0 0.0
  %737 = vmatprep.subr.mxu0 0.0
  %738 = vmatpush1.msra.mxu0 0.0
  %739 = vmatprep.subr.mxu0 0.0
  %740 = vmatpush1.msra.mxu0 0.0
  %741 = vmatprep.subr.mxu0 0.0
  %742 = vmatpush1.msra.mxu0 0.0
  %743 = vmatprep.subr.mxu0 0.0
  %744 = vmatpush1.msra.mxu0 0.0
  %745 = vmatprep.subr.mxu0 0.0
  %746 = vmatpush1.msra.mxu0 0.0
  %747 = vmatprep.subr.mxu0 0.0
  %748 = vmatpush1.msra.mxu0 0.0
  %749 = vmatprep.mubr.f32.mxu0 0.0
  %750 = vmatmul.mubr.f32.gmra.mrb[0].mxu0 %v189
  %v751 = vpop.f32.mrb[0].mxu0
  %v752 = vadd.f32 %v171, %v751
  %v753 = vpop.f32.mrb[0].mxu0
  %754 = vmatprep.mubr.f32.mxu0 0.0
  %755 = vmatmul.mubr.f32.gmra.mrb[0].mxu0 %v192
  %v756 = vpop.f32.mrb[0].mxu0
  %v757 = vadd.f32 %v176, %v756
  %v758 = vpop.f32.mrb[0].mxu0
  %759 = vmatprep.mubr.f32.mxu0 0.0
  %760 = vmatmul.mubr.f32.gmra.mrb[0].mxu0 %v195
  %v761 = vpop.f32.mrb[0].mxu0
  %v762 = vadd.f32 %v181, %v761
  %v763 = vpop.f32.mrb[0].mxu0
  %764 = vmatprep.mubr.f32.mxu0 0.0
  %765 = vmatmul.mubr.f32.gmra.mrb[0].mxu0 %v198
  %v766 = vpop.f32.mrb[0].mxu0
  %v767 = vadd.f32 %v186, %v766
  %v768 = vpop.f32.mrb[0].mxu0
  %769 = vdwg.mxu0
  %v770 = vtanh.pop %v752
  %v771 = vtanh.pop %v757
  %v772 = vtanh.pop %v762
  %v773 = vtanh.pop %v767
  %v774 = vadd.f32 %v681, %v770
  %v775 = vadd.f32 %v682, %v771
  %v776 = vadd.f32 %v683, %v772
  %v777 = vadd.f32 %v684, %v773
  %v778 = vadd.f32 %v774, %v164
  %v779 = vadd.f32 %v775, %v165
  %v780 = vadd.f32 %v776, %v166
  %v781 = vadd.f32 %v777, %v167
  %782 = vmatprep.subr.mxu0 0.0
  %783 = vmatpush1.msra.mxu0 %v778
  %784 = vmatprep.subr.mxu0 0.0
  %785 = vmatpush1.msra.mxu0 %v779
  %786 = vmatprep.subr.mxu0 0.0
  %787 = vmatpush1.msra.mxu0 %v780
  %788 = vmatprep.subr.mxu0 0.0
  %789 = vmatpush1.msra.mxu0 %v781
  %790 = vmatprep.subr.mxu0 0.0
  %791 = vmatpush1.msra.mxu0 0.0
  %792 = vmatprep.subr.mxu0 0.0
  %793 = vmatpush1.msra.mxu0 0.0
  %794 = vmatprep.subr.mxu0 0.0
  %795 = vmatpush1.msra.mxu0 0.0
  %796 = vmatprep.subr.mxu0 0.0
  %797 = vmatpush1.msra.mxu0 0.0
  %798 = vmatprep.subr.mxu0 0.0
  %799 = vmatpush1.msra.mxu0 0.0
  %800 = vmatprep.subr.mxu0 0.0
  %801 = vmatpush1.msra.mxu0 0.0
  %802 = vmatprep.subr.mxu0 0.0
  %803 = vmatpush1.msra.mxu0 0.0
  %804 = vmatprep.subr.mxu0 0.0
  %805 = vmatpush1.msra.mxu0 0.0
  %806 = vmatprep.subr.mxu0 0.0
  %807 = vmatpush1.msra.mxu0 0.0
  %808 = vmatprep.subr.mxu0 0.0
  %809 = vmatpush1.msra.mxu0 0.0
  %810 = vmatprep.subr.mxu0 0.0
  %811 = vmatpush1.msra.mxu0 0.0
  %812 = vmatprep.subr.mxu0 0.0
  %813 = vmatpush1.msra.mxu0 0.0
  %814 = vmatprep.subr.mxu0 0.0
  %815 = vmatpush1.msra.mxu0 0.0
  %816 = vmatprep.subr.mxu0 0.0
  %817 = vmatpush1.msra.mxu0 0.0
  %818 = vmatprep.subr.mxu0 0.0
  %819 = vmatpush1.msra.mxu0 0.0
  %820 = vmatprep.subr.mxu0 0.0
  %821 = vmatpush1.msra.mxu0 0.0
  %822 = vmatprep.subr.mxu0 0.0
  %823 = vmatpush1.msra.mxu0 0.0
  %824 = vmatprep.subr.mxu0 0.0
  %825 = vmatpush1.msra.mxu0 0.0
  %826 = vmatprep.subr.mxu0 0.0
  %827 = vmatpush1.msra.mxu0 0.0
  %828 = vmatprep.subr.mxu0 0.0
  %829 = vmatpush1.msra.mxu0 0.0
  %830 = vmatprep.subr.mxu0 0.0
  %831 = vmatpush1.msra.mxu0 0.0
  %832 = vmatprep.subr.mxu0 0.0
  %833 = vmatpush1.msra.mxu0 0.0
  %834 = vmatprep.subr.mxu0 0.0
  %835 = vmatpush1.msra.mxu0 0.0
  %836 = vmatprep.subr.mxu0 0.0
  %837 = vmatpush1.msra.mxu0 0.0
  %838 = vmatprep.subr.mxu0 0.0
  %839 = vmatpush1.msra.mxu0 0.0
  %840 = vmatprep.subr.mxu0 0.0
  %841 = vmatpush1.msra.mxu0 0.0
  %842 = vmatprep.subr.mxu0 0.0
  %843 = vmatpush1.msra.mxu0 0.0
  %844 = vmatprep.subr.mxu0 0.0
  %845 = vmatpush1.msra.mxu0 0.0
  %846 = vmatprep.mubr.f32.mxu0 0.0
  %847 = vmatmul.mubr.f32.gmra.mrb[0].mxu0 %v189
  %v848 = vpop.f32.mrb[0].mxu0
  %v849 = vadd.f32 %v171, %v848
  %v850 = vpop.f32.mrb[0].mxu0
  %851 = vmatprep.mubr.f32.mxu0 0.0
  %852 = vmatmul.mubr.f32.gmra.mrb[0].mxu0 %v192
  %v853 = vpop.f32.mrb[0].mxu0
  %v854 = vadd.f32 %v176, %v853
  %v855 = vpop.f32.mrb[0].mxu0
  %856 = vmatprep.mubr.f32.mxu0 0.0
  %857 = vmatmul.mubr.f32.gmra.mrb[0].mxu0 %v195
  %v858 = vpop.f32.mrb[0].mxu0
  %v859 = vadd.f32 %v181, %v858
  %v860 = vpop.f32.mrb[0].mxu0
  %861 = vmatprep.mubr.f32.mxu0 0.0
  %862 = vmatmul.mubr.f32.gmra.mrb[0].mxu0 %v198
  %v863 = vpop.f32.mrb[0].mxu0
  %v864 = vadd.f32 %v186, %v863
  %v865 = vpop.f32.mrb[0].mxu0
  %866 = vdwg.mxu0
  %v867 = vtanh.pop %v849
  %v868 = vtanh.pop %v854
  %v869 = vtanh.pop %v859
  %v870 = vtanh.pop %v864
  %v871 = vadd.f32 %v778, %v867
  %v872 = vadd.f32 %v779, %v868
  %v873 = vadd.f32 %v780, %v869
  %v874 = vadd.f32 %v781, %v870
  %v875 = vadd.f32 %v871, %v164
  %v876 = vadd.f32 %v872, %v165
  %v877 = vadd.f32 %v873, %v166
  %v878 = vadd.f32 %v874, %v167
  %879 = vmatprep.subr.mxu0 0.0
  %880 = vmatpush1.msra.mxu0 %v875
  %881 = vmatprep.subr.mxu0 0.0
  %882 = vmatpush1.msra.mxu0 %v876
  %883 = vmatprep.subr.mxu0 0.0
  %884 = vmatpush1.msra.mxu0 %v877
  %885 = vmatprep.subr.mxu0 0.0
  %886 = vmatpush1.msra.mxu0 %v878
  %887 = vmatprep.subr.mxu0 0.0
  %888 = vmatpush1.msra.mxu0 0.0
  %889 = vmatprep.subr.mxu0 0.0
  %890 = vmatpush1.msra.mxu0 0.0
  %891 = vmatprep.subr.mxu0 0.0
  %892 = vmatpush1.msra.mxu0 0.0
  %893 = vmatprep.subr.mxu0 0.0
  %894 = vmatpush1.msra.mxu0 0.0
  %895 = vmatprep.subr.mxu0 0.0
  %896 = vmatpush1.msra.mxu0 0.0
  %897 = vmatprep.subr.mxu0 0.0
  %898 = vmatpush1.msra.mxu0 0.0
  %899 = vmatprep.subr.mxu0 0.0
  %900 = vmatpush1.msra.mxu0 0.0
  %901 = vmatprep.subr.mxu0 0.0
  %902 = vmatpush1.msra.mxu0 0.0
  %903 = vmatprep.subr.mxu0 0.0
  %904 = vmatpush1.msra.mxu0 0.0
  %905 = vmatprep.subr.mxu0 0.0
  %906 = vmatpush1.msra.mxu0 0.0
  %907 = vmatprep.subr.mxu0 0.0
  %908 = vmatpush1.msra.mxu0 0.0
  %909 = vmatprep.subr.mxu0 0.0
  %910 = vmatpush1.msra.mxu0 0.0
  %911 = vmatprep.subr.mxu0 0.0
  %912 = vmatpush1.msra.mxu0 0.0
  %913 = vmatprep.subr.mxu0 0.0
  %914 = vmatpush1.msra.mxu0 0.0
  %915 = vmatprep.subr.mxu0 0.0
  %916 = vmatpush1.msra.mxu0 0.0
  %917 = vmatprep.subr.mxu0 0.0
  %918 = vmatpush1.msra.mxu0 0.0
  %919 = vmatprep.subr.mxu0 0.0
  %920 = vmatpush1.msra.mxu0 0.0
  %921 = vmatprep.subr.mxu0 0.0
  %922 = vmatpush1.msra.mxu0 0.0
  %923 = vmatprep.subr.mxu0 0.0
  %924 = vmatpush1.msra.mxu0 0.0
  %925 = vmatprep.subr.mxu0 0.0
  %926 = vmatpush1.msra.mxu0 0.0
  %927 = vmatprep.subr.mxu0 0.0
  %928 = vmatpush1.msra.mxu0 0.0
  %929 = vmatprep.subr.mxu0 0.0
  %930 = vmatpush1.msra.mxu0 0.0
  %931 = vmatprep.subr.mxu0 0.0
  %932 = vmatpush1.msra.mxu0 0.0
  %933 = vmatprep.subr.mxu0 0.0
  %934 = vmatpush1.msra.mxu0 0.0
  %935 = vmatprep.subr.mxu0 0.0
  %936 = vmatpush1.msra.mxu0 0.0
  %937 = vmatprep.subr.mxu0 0.0
  %938 = vmatpush1.msra.mxu0 0.0
  %939 = vmatprep.subr.mxu0 0.0
  %940 = vmatpush1.msra.mxu0 0.0
  %941 = vmatprep.subr.mxu0 0.0
  %942 = vmatpush1.msra.mxu0 0.0
  %943 = vmatprep.mubr.f32.mxu0 0.0
  %944 = vmatmul.mubr.f32.gmra.mrb[0].mxu0 %v189
  %v945 = vpop.f32.mrb[0].mxu0
  %v946 = vadd.f32 %v171, %v945
  %v947 = vpop.f32.mrb[0].mxu0
  %948 = vmatprep.mubr.f32.mxu0 0.0
  %949 = vmatmul.mubr.f32.gmra.mrb[0].mxu0 %v192
  %v950 = vpop.f32.mrb[0].mxu0
  %v951 = vadd.f32 %v176, %v950
  %v952 = vpop.f32.mrb[0].mxu0
  %953 = vmatprep.mubr.f32.mxu0 0.0
  %954 = vmatmul.mubr.f32.gmra.mrb[0].mxu0 %v195
  %v955 = vpop.f32.mrb[0].mxu0
  %v956 = vadd.f32 %v181, %v955
  %v957 = vpop.f32.mrb[0].mxu0
  %958 = vmatprep.mubr.f32.mxu0 0.0
  %959 = vmatmul.mubr.f32.gmra.mrb[0].mxu0 %v198
  %v960 = vpop.f32.mrb[0].mxu0
  %v961 = vadd.f32 %v186, %v960
  %v962 = vpop.f32.mrb[0].mxu0
  %963 = vdwg.mxu0
  %v964 = vtanh.pop %v946
  %v965 = vtanh.pop %v951
  %v966 = vtanh.pop %v956
  %v967 = vtanh.pop %v961
  %v968 = vadd.f32 %v875, %v964
  %v969 = vadd.f32 %v876, %v965
  %v970 = vadd.f32 %v877, %v966
  %v971 = vadd.f32 %v878, %v967
  %v972 = vadd.f32 %v968, %v164
  %v973 = vadd.f32 %v969, %v165
  %v974 = vadd.f32 %v970, %v166
  %v975 = vadd.f32 %v971, %v167
  %976 = vmatprep.subr.mxu0 0.0
  %977 = vmatpush1.msra.mxu0 %v972
  %978 = vmatprep.subr.mxu0 0.0
  %979 = vmatpush1.msra.mxu0 %v973
  %980 = vmatprep.subr.mxu0 0.0
  %981 = vmatpush1.msra.mxu0 %v974
  %982 = vmatprep.subr.mxu0 0.0
  %983 = vmatpush1.msra.mxu0 %v975
  %984 = vmatprep.subr.mxu0 0.0
  %985 = vmatpush1.msra.mxu0 0.0
  %986 = vmatprep.subr.mxu0 0.0
  %987 = vmatpush1.msra.mxu0 0.0
  %988 = vmatprep.subr.mxu0 0.0
  %989 = vmatpush1.msra.mxu0 0.0
  %990 = vmatprep.subr.mxu0 0.0
  %991 = vmatpush1.msra.mxu0 0.0
  %992 = vmatprep.subr.mxu0 0.0
  %993 = vmatpush1.msra.mxu0 0.0
  %994 = vmatprep.subr.mxu0 0.0
  %995 = vmatpush1.msra.mxu0 0.0
  %996 = vmatprep.subr.mxu0 0.0
  %997 = vmatpush1.msra.mxu0 0.0
  %998 = vmatprep.subr.mxu0 0.0
  %999 = vmatpush1.msra.mxu0 0.0
  %1000 = vmatprep.subr.mxu0 0.0
  %1001 = vmatpush1.msra.mxu0 0.0
  %1002 = vmatprep.subr.mxu0 0.0
  %1003 = vmatpush1.msra.mxu0 0.0
  %1004 = vmatprep.subr.mxu0 0.0
  %1005 = vmatpush1.msra.mxu0 0.0
  %1006 = vmatprep.subr.mxu0 0.0
  %1007 = vmatpush1.msra.mxu0 0.0
  %1008 = vmatprep.subr.mxu0 0.0
  %1009 = vmatpush1.msra.mxu0 0.0
  %1010 = vmatprep.subr.mxu0 0.0
  %1011 = vmatpush1.msra.mxu0 0.0
  %1012 = vmatprep.subr.mxu0 0.0
  %1013 = vmatpush1.msra.mxu0 0.0
  %1014 = vmatprep.subr.mxu0 0.0
  %1015 = vmatpush1.msra.mxu0 0.0
  %1016 = vmatprep.subr.mxu0 0.0
  %1017 = vmatpush1.msra.mxu0 0.0
  %1018 = vmatprep.subr.mxu0 0.0
  %1019 = vmatpush1.msra.mxu0 0.0
  %1020 = vmatprep.subr.mxu0 0.0
  %1021 = vmatpush1.msra.mxu0 0.0
  %1022 = vmatprep.subr.mxu0 0.0
  %1023 = vmatpush1.msra.mxu0 0.0
  %1024 = vmatprep.subr.mxu0 0.0
  %1025 = vmatpush1.msra.mxu0 0.0
  %1026 = vmatprep.subr.mxu0 0.0
  %1027 = vmatpush1.msra.mxu0 0.0
  %1028 = vmatprep.subr.mxu0 0.0
  %1029 = vmatpush1.msra.mxu0 0.0
  %1030 = vmatprep.subr.mxu0 0.0
  %1031 = vmatpush1.msra.mxu0 0.0
  %1032 = vmatprep.subr.mxu0 0.0
  %1033 = vmatpush1.msra.mxu0 0.0
  %1034 = vmatprep.subr.mxu0 0.0
  %1035 = vmatpush1.msra.mxu0 0.0
  %1036 = vmatprep.subr.mxu0 0.0
  %1037 = vmatpush1.msra.mxu0 0.0
  %1038 = vmatprep.subr.mxu0 0.0
  %1039 = vmatpush1.msra.mxu0 0.0
  %1040 = vmatprep.mubr.f32.mxu0 0.0
  %1041 = vmatmul.mubr.f32.gmra.mrb[0].mxu0 %v189
  %v1042 = vpop.f32.mrb[0].mxu0
  %v1043 = vadd.f32 %v171, %v1042
  %v1044 = vpop.f32.mrb[0].mxu0
  %1045 = vmatprep.mubr.f32.mxu0 0.0
  %1046 = vmatmul.mubr.f32.gmra.mrb[0].mxu0 %v192
  %v1047 = vpop.f32.mrb[0].mxu0
  %v1048 = vadd.f32 %v176, %v1047
  %v1049 = vpop.f32.mrb[0].mxu0
  %1050 = vmatprep.mubr.f32.mxu0 0.0
  %1051 = vmatmul.mubr.f32.gmra.mrb[0].mxu0 %v195
  %v1052 = vpop.f32.mrb[0].mxu0
  %v1053 = vadd.f32 %v181, %v1052
  %v1054 = vpop.f32.mrb[0].mxu0
  %1055 = vmatprep.mubr.f32.mxu0 0.0
  %1056 = vmatmul.mubr.f32.gmra.mrb[0].mxu0 %v198
  %v1057 = vpop.f32.mrb[0].mxu0
  %v1058 = vadd.f32 %v186, %v1057
  %v1059 = vpop.f32.mrb[0].mxu0
  %1060 = vdwg.mxu0
  %v1061 = vtanh.pop %v1043
  %v1062 = vtanh.pop %v1048
  %v1063 = vtanh.pop %v1053
  %v1064 = vtanh.pop %v1058
  %v1065 = vadd.f32 %v972, %v1061
  %v1066 = vadd.f32 %v973, %v1062
  %v1067 = vadd.f32 %v974, %v1063
  %v1068 = vadd.f32 %v975, %v1064
  %v1069 = vadd.f32 %v1065, %v164
  %v1070 = vadd.f32 %v1066, %v165
  %v1071 = vadd.f32 %v1067, %v166
  %v1072 = vadd.f32 %v1068, %v167
  %1073 = vmatprep.subr.mxu0 0.0
  %1074 = vmatpush1.msra.mxu0 %v1069
  %1075 = vmatprep.subr.mxu0 0.0
  %1076 = vmatpush1.msra.mxu0 %v1070
  %1077 = vmatprep.subr.mxu0 0.0
  %1078 = vmatpush1.msra.mxu0 %v1071
  %1079 = vmatprep.subr.mxu0 0.0
  %1080 = vmatpush1.msra.mxu0 %v1072
  %1081 = vmatprep.subr.mxu0 0.0
  %1082 = vmatpush1.msra.mxu0 0.0
  %1083 = vmatprep.subr.mxu0 0.0
  %1084 = vmatpush1.msra.mxu0 0.0
  %1085 = vmatprep.subr.mxu0 0.0
  %1086 = vmatpush1.msra.mxu0 0.0
  %1087 = vmatprep.subr.mxu0 0.0
  %1088 = vmatpush1.msra.mxu0 0.0
  %1089 = vmatprep.subr.mxu0 0.0
  %1090 = vmatpush1.msra.mxu0 0.0
  %1091 = vmatprep.subr.mxu0 0.0
  %1092 = vmatpush1.msra.mxu0 0.0
  %1093 = vmatprep.subr.mxu0 0.0
  %1094 = vmatpush1.msra.mxu0 0.0
  %1095 = vmatprep.subr.mxu0 0.0
  %1096 = vmatpush1.msra.mxu0 0.0
  %1097 = vmatprep.subr.mxu0 0.0
  %1098 = vmatpush1.msra.mxu0 0.0
  %1099 = vmatprep.subr.mxu0 0.0
  %1100 = vmatpush1.msra.mxu0 0.0
  %1101 = vmatprep.subr.mxu0 0.0
  %1102 = vmatpush1.msra.mxu0 0.0
  %1103 = vmatprep.subr.mxu0 0.0
  %1104 = vmatpush1.msra.mxu0 0.0
  %1105 = vmatprep.subr.mxu0 0.0
  %1106 = vmatpush1.msra.mxu0 0.0
  %1107 = vmatprep.subr.mxu0 0.0
  %1108 = vmatpush1.msra.mxu0 0.0
  %1109 = vmatprep.subr.mxu0 0.0
  %1110 = vmatpush1.msra.mxu0 0.0
  %1111 = vmatprep.subr.mxu0 0.0
  %1112 = vmatpush1.msra.mxu0 0.0
  %1113 = vmatprep.subr.mxu0 0.0
  %1114 = vmatpush1.msra.mxu0 0.0
  %1115 = vmatprep.subr.mxu0 0.0
  %1116 = vmatpush1.msra.mxu0 0.0
  %1117 = vmatprep.subr.mxu0 0.0
  %1118 = vmatpush1.msra.mxu0 0.0
  %1119 = vmatprep.subr.mxu0 0.0
  %1120 = vmatpush1.msra.mxu0 0.0
  %1121 = vmatprep.subr.mxu0 0.0
  %1122 = vmatpush1.msra.mxu0 0.0
  %1123 = vmatprep.subr.mxu0 0.0
  %1124 = vmatpush1.msra.mxu0 0.0
  %1125 = vmatprep.subr.mxu0 0.0
  %1126 = vmatpush1.msra.mxu0 0.0
  %1127 = vmatprep.subr.mxu0 0.0
  %1128 = vmatpush1.msra.mxu0 0.0
  %1129 = vmatprep.subr.mxu0 0.0
  %1130 = vmatpush1.msra.mxu0 0.0
  %1131 = vmatprep.subr.mxu0 0.0
  %1132 = vmatpush1.msra.mxu0 0.0
  %1133 = vmatprep.subr.mxu0 0.0
  %1134 = vmatpush1.msra.mxu0 0.0
  %1135 = vmatprep.subr.mxu0 0.0
  %1136 = vmatpush1.msra.mxu0 0.0
  %1137 = vmatprep.mubr.f32.mxu0 0.0
  %1138 = vmatmul.mubr.f32.gmra.mrb[0].mxu0 %v189
  %v1139 = vpop.f32.mrb[0].mxu0
  %v1140 = vadd.f32 %v171, %v1139
  %v1141 = vpop.f32.mrb[0].mxu0
  %1142 = vmatprep.mubr.f32.mxu0 0.0
  %1143 = vmatmul.mubr.f32.gmra.mrb[0].mxu0 %v192
  %v1144 = vpop.f32.mrb[0].mxu0
  %v1145 = vadd.f32 %v176, %v1144
  %v1146 = vpop.f32.mrb[0].mxu0
  %1147 = vmatprep.mubr.f32.mxu0 0.0
  %1148 = vmatmul.mubr.f32.gmra.mrb[0].mxu0 %v195
  %v1149 = vpop.f32.mrb[0].mxu0
  %v1150 = vadd.f32 %v181, %v1149
  %v1151 = vpop.f32.mrb[0].mxu0
  %1152 = vmatprep.mubr.f32.mxu0 0.0
  %1153 = vmatmul.mubr.f32.gmra.mrb[0].mxu0 %v198
  %v1154 = vpop.f32.mrb[0].mxu0
  %v1155 = vadd.f32 %v186, %v1154
  %v1156 = vpop.f32.mrb[0].mxu0
  %1157 = vdwg.mxu0
  %v1158 = vtanh.pop %v1140
  %v1159 = vtanh.pop %v1145
  %v1160 = vtanh.pop %v1150
  %v1161 = vtanh.pop %v1155
  %v1162 = vadd.f32 %v1069, %v1158
  %v1163 = vadd.f32 %v1070, %v1159
  %v1164 = vadd.f32 %v1071, %v1160
  %v1165 = vadd.f32 %v1072, %v1161
  %v1166 = vadd.f32 %v1162, %v164
  %v1167 = vadd.f32 %v1163, %v165
  %v1168 = vadd.f32 %v1164, %v166
  %v1169 = vadd.f32 %v1165, %v167
  %v1170 = vld [vmem:[%s5] sm:$0xff]
  %v1171 = vld [vmem:[%s5 + $0x8] sm:$0xff]
  %v1172 = vld [vmem:[%s6] sm:$0xff]
  %v1173 = vld [vmem:[%s6 + $0x8] sm:$0xff]
  %1175 = vset.pattern.permute.xlu0 0
  %1176 = vperm.xlu0 %1175, %v1172
  %v1177 = vpop.permute.xlu0 %1176
  %1180 = vset.pattern.permute.xlu0 0
  %1181 = vperm.xlu0 %1180, %v1173
  %v1182 = vpop.permute.xlu0 %1181
  %v1185 = vsel %vm66, %v1170, 0
  %v1188 = vsel %vm66, %v1171, 0
  %1190 = vmatprep.subr.mxu0 0.0
  %1191 = vmatpush1.msra.mxu0 %v1166
  %1192 = vmatprep.subr.mxu0 0.0
  %1193 = vmatpush1.msra.mxu0 %v1167
  %1194 = vmatprep.subr.mxu0 0.0
  %1195 = vmatpush1.msra.mxu0 %v1168
  %1196 = vmatprep.subr.mxu0 0.0
  %1197 = vmatpush1.msra.mxu0 %v1169
  %1198 = vmatprep.subr.mxu0 0.0
  %1199 = vmatpush1.msra.mxu0 0.0
  %1200 = vmatprep.subr.mxu0 0.0
  %1201 = vmatpush1.msra.mxu0 0.0
  %1202 = vmatprep.subr.mxu0 0.0
  %1203 = vmatpush1.msra.mxu0 0.0
  %1204 = vmatprep.subr.mxu0 0.0
  %1205 = vmatpush1.msra.mxu0 0.0
  %1206 = vmatprep.subr.mxu0 0.0
  %1207 = vmatpush1.msra.mxu0 0.0
  %1208 = vmatprep.subr.mxu0 0.0
  %1209 = vmatpush1.msra.mxu0 0.0
  %1210 = vmatprep.subr.mxu0 0.0
  %1211 = vmatpush1.msra.mxu0 0.0
  %1212 = vmatprep.subr.mxu0 0.0
  %1213 = vmatpush1.msra.mxu0 0.0
  %1214 = vmatprep.subr.mxu0 0.0
  %1215 = vmatpush1.msra.mxu0 0.0
  %1216 = vmatprep.subr.mxu0 0.0
  %1217 = vmatpush1.msra.mxu0 0.0
  %1218 = vmatprep.subr.mxu0 0.0
  %1219 = vmatpush1.msra.mxu0 0.0
  %1220 = vmatprep.subr.mxu0 0.0
  %1221 = vmatpush1.msra.mxu0 0.0
  %1222 = vmatprep.subr.mxu0 0.0
  %1223 = vmatpush1.msra.mxu0 0.0
  %1224 = vmatprep.subr.mxu0 0.0
  %1225 = vmatpush1.msra.mxu0 0.0
  %1226 = vmatprep.subr.mxu0 0.0
  %1227 = vmatpush1.msra.mxu0 0.0
  %1228 = vmatprep.subr.mxu0 0.0
  %1229 = vmatpush1.msra.mxu0 0.0
  %1230 = vmatprep.subr.mxu0 0.0
  %1231 = vmatpush1.msra.mxu0 0.0
  %1232 = vmatprep.subr.mxu0 0.0
  %1233 = vmatpush1.msra.mxu0 0.0
  %1234 = vmatprep.subr.mxu0 0.0
  %1235 = vmatpush1.msra.mxu0 0.0
  %1236 = vmatprep.subr.mxu0 0.0
  %1237 = vmatpush1.msra.mxu0 0.0
  %1238 = vmatprep.subr.mxu0 0.0
  %1239 = vmatpush1.msra.mxu0 0.0
  %1240 = vmatprep.subr.mxu0 0.0
  %1241 = vmatpush1.msra.mxu0 0.0
  %1242 = vmatprep.subr.mxu0 0.0
  %1243 = vmatpush1.msra.mxu0 0.0
  %1244 = vmatprep.subr.mxu0 0.0
  %1245 = vmatpush1.msra.mxu0 0.0
  %1246 = vmatprep.subr.mxu0 0.0
  %1247 = vmatpush1.msra.mxu0 0.0
  %1248 = vmatprep.subr.mxu0 0.0
  %1249 = vmatpush1.msra.mxu0 0.0
  %1250 = vmatprep.subr.mxu0 0.0
  %1251 = vmatpush1.msra.mxu0 0.0
  %1252 = vmatprep.subr.mxu0 0.0
  %1253 = vmatpush1.msra.mxu0 0.0
  %1254 = vmatprep.mubr.f32.mxu0 0.0
  %1255 = vmatmul.mubr.f32.gmra.mrb[0].mxu0 %v1185
  %v1256 = vpop.f32.mrb[0].mxu0
  %v1257 = vadd.f32 %v1177, %v1256
  %v1258 = vpop.f32.mrb[0].mxu0
  %1259 = vmatprep.mubr.f32.mxu0 0.0
  %1260 = vmatmul.mubr.f32.gmra.mrb[0].mxu0 %v1188
  %v1261 = vpop.f32.mrb[0].mxu0
  %v1262 = vadd.f32 %v1182, %v1261
  %v1263 = vpop.f32.mrb[0].mxu0
  %1264 = vdwg.mxu0
  %1265 = vst [vmem:[%s7] sm:$0xff] %v1257
  %1266 = vst [vmem:[%s7 + $0x8] sm:$0xff] %v1262
  // Predicated region
  $region30: #{model_basic_forward.1} parent=0 // pred_check
    _
  $region31: #{model_basic_forward.1} parent=0 // pred_check_branch
    %1268 = sbr.rel (0) target = $region33
  $region32: #{model_basic_forward.1} parent=0 // pred_region
    _
  $region33: #{model_basic_forward.1} parent=0 // pred_fallthru
    _
  // Predicated region
  $region34: #{model_basic_forward.1} parent=0 // pred_check
    _
  $region35: #{model_basic_forward.1} parent=0 // pred_check_branch
    %1270 = sbr.rel (0) target = $region37
  $region36: #{model_basic_forward.1} parent=0 // pred_region
    _
  $region37: #{model_basic_forward.1} parent=0 // pred_fallthru
    _

</llo_original>
